<compile_context>
chip_gen: v6e
topology: v6e:2x2x1
jax: 0.10.0
libtpu: 0.0.40
codegen_flags: <defaults>
</compile_context>

<pallas_src>
import functools

import jax
import jax.numpy as jnp
from jax import lax
from jax.experimental import pallas as pl
from jax.experimental.pallas import tpu as pltpu

_LANE = 128

# Per-generation tiling / VMEM configuration.
#   v7x : 64 MiB physical VMEM, 3.2 TB/s HBM -> ~7 MiB pred blocks, 48 MiB limit.
#   v6e : 128 MiB physical VMEM              -> ~6 MiB pred blocks, 80 MiB limit.
#   v5e : ~820 GB/s HBM, 2-4 MiB blocks already amortize overhead; 32 MiB limit.
_GEN_CFG = {
    "v7x": dict(target_block_bytes=7 * 2**20, vmem_budget_bytes=44 * 2**20,
                vmem_limit_bytes=48 * 2**20),
    "v6e": dict(target_block_bytes=6 * 2**20, vmem_budget_bytes=72 * 2**20,
                vmem_limit_bytes=80 * 2**20),
    "v5e": dict(target_block_bytes=3 * 2**20, vmem_budget_bytes=28 * 2**20,
                vmem_limit_bytes=32 * 2**20),
    "default": dict(target_block_bytes=3 * 2**20, vmem_budget_bytes=28 * 2**20,
                    vmem_limit_bytes=32 * 2**20),
}


def _tpu_generation():
    try:
        kind = jax.devices()[0].device_kind.lower()
    except Exception:  # pragma: no cover - defensive, CPU interpret etc.
        return "default"
    if "v7" in kind:
        return "v7x"
    if "v6" in kind:
        return "v6e"
    if "v5" in kind:
        return "v5e"
    return "default"


def _sublane_pack(itemsize):
    # Elements per sublane group: f32 -> 8, bf16/i16 -> 16, i8 -> 32.
    return {4: 8, 2: 16, 1: 32}.get(itemsize, 8)


def _pick_tile(hw, c, itemsize, cfg):
    """Lane-dense HW tile: multiple of 128, generation-sized pred block, VMEM-safe."""
    hw_pad = -(-hw // _LANE) * _LANE
    pack = _sublane_pack(itemsize)
    c_pad = -(-c // pack) * pack  # sublane-padded class count actually held in VMEM

    # Per-lane (per HW column) VMEM bytes:
    #   pred block, double-buffered, with sublane-padded C
    #   label (1,t) int32, argmax out, loss out: each padded to 8 sublanes, dbl-buffered
    #   ~4 full-tile f32 temporaries materialized in-kernel
    #   (x upcast, exp(x - m), class iota, select result).
    per_col = (
        2 * c_pad * itemsize      # pred (double-buffered)
        + 2 * 8 * 4               # label row (int32, 8-sublane padded, dbuf)
        + 2 * 8 * 4               # argmax row (worst-case int32, dbuf)
        + 2 * 8 * 4               # loss row (f32, dbuf/resident)
        + 4 * c_pad * 4           # in-kernel f32 temporaries
    )
    t = min(
        hw_pad,
        max(cfg["target_block_bytes"] // max(c * itemsize, 1), _LANE),
        max(cfg["vmem_budget_bytes"] // per_col, _LANE),
    )
    return max(_LANE, (t // _LANE) * _LANE)


def _ce_kernel(pred_ref, label_ref, loss_ref, amax_ref, *, hw_total, t_hw, accumulate):
    j = pl.program_id(1)

    # Upcast in-kernel (mandatory f32 math; v5e has no bf16 VPU/EUP).
    # TODO(synk): on v7x with bf16 pred the single EUP may become the bottleneck
    # once HBM is ~3.2 TB/s; if profiling shows that, keep max/compare/select in
    # bf16 and only upcast for the exp/log-sum path.
    x = pred_ref[...].astype(jnp.float32)      # (C, t_hw)
    lab = label_ref[...]                       # (1, t_hw) int32
    C = x.shape[0]

    # --- log-softmax NLL per column (class axis = sublane axis 0) ---
    m = jnp.max(x, axis=0, keepdims=True)                               # (1, t_hw)
    lse = jnp.log(jnp.sum(jnp.exp(x - m), axis=0, keepdims=True)) + m   # (1, t_hw)
    cls = lax.broadcasted_iota(jnp.int32, x.shape, 0)                   # (C, t_hw)
    # Select instead of one-hot multiply: one fewer full-tile cast + multiply.
    x_true = jnp.sum(jnp.where(cls == lab, x, 0.0), axis=0, keepdims=True)
    losses = lse - x_true                                               # (1, t_hw)

    # --- argmax over class axis (first index among ties, matches jnp.argmax) ---
    amax = jnp.min(jnp.where(x == m, cls, C), axis=0, keepdims=True)    # (1, t_hw)
    amax_ref[...] = amax.astype(amax_ref.dtype)

    if accumulate:
        # Per-lane resident partial-loss accumulator (per batch item).
        @pl.when(j == 0)
        def _():
            loss_ref[...] = jnp.zeros_like(loss_ref)

        if hw_total % t_hw != 0:
            last = pl.num_programs(1) - 1

            @pl.when(j != last)
            def _():
                loss_ref[...] += losses

            @pl.when(j == last)
            def _():
                # Mask columns past the true H*W extent (only on the ragged tile).
                col = j * t_hw + lax.broadcasted_iota(jnp.int32, (1, t_hw), 1)
                loss_ref[...] += jnp.where(col < hw_total, losses, 0.0)
        else:
            loss_ref[...] += losses
    else:
        # Fully-parallel variant: per-tile loss writeback; Pallas masks the
        # out-of-bounds columns of a ragged last tile on writeback.
        loss_ref[...] = losses


def loss_ce(pred, label, ori=None):
    """pred: (N, C, H, W) float, label: (N, H, W) int -> (scalar loss, (N,H,W) argmax)."""
    N, C, H, W = pred.shape
    HW = H * W
    M = N * HW

    # Zero-copy views: NCHW kept as-is -> (N, C, HW); no HBM transpose pass.
    pred3 = pred.reshape(N, C, HW)
    lab3 = label.reshape(N, 1, HW).astype(jnp.int32)

    gen = _tpu_generation()
    cfg = _GEN_CFG.get(gen, _GEN_CFG["default"])
    itemsize = jnp.dtype(pred.dtype).itemsize
    t_hw = _pick_tile(HW, C, itemsize, cfg)
    num_j = pl.cdiv(HW, t_hw)

    # Narrow argmax writeback (it is pure HBM traffic on a memory-bound kernel).
    amax_dtype = jnp.int16 if C <= 32767 else jnp.int32

    # v7x has 2 TensorCores/chip: with a small batch, emit per-tile losses so
    # both grid axes can be parallel instead of reserving j as "arbitrary".
    accumulate = not (gen == "v7x" and N < 4 and num_j > 1)

    kernel = functools.partial(_ce_kernel, hw_total=HW, t_hw=t_hw,
                               accumulate=accumulate)

    if accumulate:
        loss_out_shape = jax.ShapeDtypeStruct((N, 1, t_hw), jnp.float32)
        loss_out_spec = pl.BlockSpec((None, 1, t_hw), lambda n, j: (n, 0, 0))  # resident
        dims = ("parallel", "arbitrary")
    else:
        loss_out_shape = jax.ShapeDtypeStruct((N, 1, HW), jnp.float32)
        loss_out_spec = pl.BlockSpec((None, 1, t_hw), lambda n, j: (n, 0, j))
        dims = ("parallel", "parallel")

    loss_part, amax = pl.pallas_call(
        kernel,
        out_shape=(
            loss_out_shape,                                   # loss partials
            jax.ShapeDtypeStruct((N, 1, HW), amax_dtype),     # argmax over classes
        ),
        grid_spec=pltpu.PrefetchScalarGridSpec(
            num_scalar_prefetch=0,
            grid=(N, num_j),
            in_specs=[
                pl.BlockSpec((None, C, t_hw), lambda n, j: (n, 0, j)),
                pl.BlockSpec((None, 1, t_hw), lambda n, j: (n, 0, j)),
            ],
            out_specs=(
                loss_out_spec,
                pl.BlockSpec((None, 1, t_hw), lambda n, j: (n, 0, j)),
            ),
        ),
        compiler_params=pltpu.CompilerParams(
            dimension_semantics=dims,
            vmem_limit_bytes=cfg["vmem_limit_bytes"],
        ),
    )(pred3, lab3)

    loss = jnp.sum(loss_part) / jnp.float32(M)
    Y_pred = amax.astype(jnp.int32).reshape(N, H, W)
    return loss, Y_pred


def _reference(pred, label):
    """Pure-JAX reference matching torch.nn.CrossEntropyLoss (mean) + argmax(dim=1)."""
    N, C, H, W = pred.shape
    logp = jax.nn.log_softmax(pred.astype(jnp.float32), axis=1)
    lab_oh = jax.nn.one_hot(label, C, axis=1, dtype=jnp.float32)
    loss = -jnp.sum(logp * lab_oh) / (N * H * W)
    return loss, jnp.argmax(pred, axis=1)


if __name__ == "__main__":
    key = jax.random.PRNGKey(0)
    k1, k2 = jax.random.split(key)
    N, C, H, W = 2, 4, 16, 16
    pred = jax.random.normal(k1, (N, C, H, W), dtype=jnp.float32)
    label = jax.random.randint(k2, (N, H, W), 0, C, dtype=jnp.int32)
    ori = jnp.zeros((N, H, W), jnp.float32)  # unused by forward, kept for signature parity

    loss, y_pred = loss_ce(pred, label, ori)
    loss = jax.block_until_ready(loss)
    y_pred = jax.block_until_ready(y_pred)

    ref_loss, ref_pred = _reference(pred, label)
    assert jnp.allclose(loss, ref_loss, atol=1e-5, rtol=1e-5), (loss, ref_loss)
    assert jnp.array_equal(y_pred, ref_pred.astype(jnp.int32))

    print("KERNEL_OK")
</pallas_src>

<mosaic_0001>
module attributes {stable_mosaic.version = 11 : i64} {
  func.func @_ce_kernel(%arg0: i32, %arg1: i32, %arg2: memref<1x4x256xf32, #tpu.memory_space<vmem>>, %arg3: memref<1x1x256xi32, #tpu.memory_space<vmem>>, %arg4: memref<1x1x256xf32, #tpu.memory_space<vmem>>, %arg5: memref<1x1x256xi16, #tpu.memory_space<vmem>>) attributes {dimension_semantics = [#tpu.dimension_semantics<parallel>, #tpu.dimension_semantics<arbitrary>], iteration_bounds = array<i64: 2, 1>, scalar_prefetch = 0 : i64, scratch_operands = 0 : i64, tpu.core_type = #tpu.core_type<tc>, window_params = [{transform_indices = @transform_0, window_bounds = array<i64: 1, 4, 256>}, {transform_indices = @transform_1, window_bounds = array<i64: 1, 1, 256>}, {transform_indices = @transform_2, window_bounds = array<i64: 1, 1, 256>}, {transform_indices = @transform_3, window_bounds = array<i64: 1, 1, 256>}]} {
    %c0 = arith.constant 0 : index
    %c0_0 = arith.constant 0 : index
    %c0_1 = arith.constant 0 : index
    %0 = vector.load %arg2[%c0, %c0_0, %c0_1] : memref<1x4x256xf32, #tpu.memory_space<vmem>>, vector<1x4x256xf32>
    %1 = vector.shape_cast %0 : vector<1x4x256xf32> to vector<4x256xf32>
    %c0_2 = arith.constant 0 : index
    %c0_3 = arith.constant 0 : index
    %c0_4 = arith.constant 0 : index
    %2 = vector.load %arg3[%c0_2, %c0_3, %c0_4] : memref<1x1x256xi32, #tpu.memory_space<vmem>>, vector<1x1x256xi32>
    %3 = vector.shape_cast %2 : vector<1x1x256xi32> to vector<1x256xi32>
    %cst = arith.constant dense<0xFF800000> : vector<256xf32>
    %4 = vector.multi_reduction <maximumf>, %1, %cst [0] : vector<4x256xf32> to vector<256xf32>
    %5 = vector.shape_cast %4 : vector<256xf32> to vector<1x256xf32>
    %6 = vector.broadcast %5 : vector<1x256xf32> to vector<4x256xf32>
    %7 = arith.subf %1, %6 : vector<4x256xf32>
    %8 = math.exp %7 : vector<4x256xf32>
    %cst_5 = arith.constant dense<0.000000e+00> : vector<256xf32>
    %9 = vector.multi_reduction <add>, %8, %cst_5 [0] : vector<4x256xf32> to vector<256xf32>
    %10 = vector.shape_cast %9 : vector<256xf32> to vector<1x256xf32>
    %11 = math.log %10 : vector<1x256xf32>
    %12 = arith.addf %11, %5 : vector<1x256xf32>
    %13 = tpu.iota {dimensions = array<i32: 0>} : vector<4x256xi32>
    %14 = vector.broadcast %3 : vector<1x256xi32> to vector<4x256xi32>
    %15 = arith.cmpi eq, %13, %14 : vector<4x256xi32>
    %cst_6 = arith.constant 0.000000e+00 : f32
    %16 = vector.broadcast %cst_6 : f32 to vector<4x256xf32>
    %17 = arith.select %15, %1, %16 : vector<4x256xi1>, vector<4x256xf32>
    %cst_7 = arith.constant dense<0.000000e+00> : vector<256xf32>
    %18 = vector.multi_reduction <add>, %17, %cst_7 [0] : vector<4x256xf32> to vector<256xf32>
    %19 = vector.shape_cast %18 : vector<256xf32> to vector<1x256xf32>
    %20 = arith.subf %12, %19 : vector<1x256xf32>
    %21 = vector.broadcast %5 : vector<1x256xf32> to vector<4x256xf32>
    %22 = arith.cmpf oeq, %1, %21 : vector<4x256xf32>
    %c4_i32 = arith.constant 4 : i32
    %23 = vector.broadcast %c4_i32 : i32 to vector<4x256xi32>
    %24 = arith.select %22, %13, %23 : vector<4x256xi1>, vector<4x256xi32>
    %cst_8 = arith.constant dense<2147483647> : vector<256xi32>
    %25 = vector.multi_reduction <minsi>, %24, %cst_8 [0] : vector<4x256xi32> to vector<256xi32>
    %26 = vector.shape_cast %25 : vector<256xi32> to vector<1x256xi32>
    %27 = arith.trunci %26 : vector<1x256xi32> to vector<1x256xi16>
    %c0_9 = arith.constant 0 : index
    %c0_10 = arith.constant 0 : index
    %c0_11 = arith.constant 0 : index
    %28 = vector.load %arg5[%c0_9, %c0_10, %c0_11] : memref<1x1x256xi16, #tpu.memory_space<vmem>>, vector<1x1x256xi16>
    %29 = vector.shape_cast %28 : vector<1x1x256xi16> to vector<1x256xi16>
    %30 = vector.shape_cast %27 : vector<1x256xi16> to vector<1x1x256xi16>
    tpu.vector_store %arg5[%c0_9, %c0_10, %c0_11], %30 {strides = array<i32>} : memref<1x1x256xi16, #tpu.memory_space<vmem>>, vector<1x1x256xi16>,
    %c0_i32 = arith.constant 0 : i32
    %31 = arith.cmpi eq, %arg1, %c0_i32 : i32
    %32 = arith.extui %31 : i1 to i32
    %c0_i32_12 = arith.constant 0 : i32
    %33 = arith.cmpi ne, %32, %c0_i32_12 : i32
    scf.if %33 {
      %cst_19 = arith.constant 0.000000e+00 : f32
      %40 = vector.broadcast %cst_19 : f32 to vector<1x256xf32>
      %c0_20 = arith.constant 0 : index
      %c0_21 = arith.constant 0 : index
      %c0_22 = arith.constant 0 : index
      %41 = vector.load %arg4[%c0_20, %c0_21, %c0_22] : memref<1x1x256xf32, #tpu.memory_space<vmem>>, vector<1x1x256xf32>
      %42 = vector.shape_cast %41 : vector<1x1x256xf32> to vector<1x256xf32>
      %43 = vector.shape_cast %40 : vector<1x256xf32> to vector<1x1x256xf32>
      tpu.vector_store %arg4[%c0_20, %c0_21, %c0_22], %43 {strides = array<i32>} : memref<1x1x256xf32, #tpu.memory_space<vmem>>, vector<1x1x256xf32>,
    } else {
    }
    %c0_13 = arith.constant 0 : index
    %c0_14 = arith.constant 0 : index
    %c0_15 = arith.constant 0 : index
    %34 = vector.load %arg4[%c0_13, %c0_14, %c0_15] : memref<1x1x256xf32, #tpu.memory_space<vmem>>, vector<1x1x256xf32>
    %35 = vector.shape_cast %34 : vector<1x1x256xf32> to vector<1x256xf32>
    %36 = arith.addf %35, %20 : vector<1x256xf32>
    %c0_16 = arith.constant 0 : index
    %c0_17 = arith.constant 0 : index
    %c0_18 = arith.constant 0 : index
    %37 = vector.load %arg4[%c0_16, %c0_17, %c0_18] : memref<1x1x256xf32, #tpu.memory_space<vmem>>, vector<1x1x256xf32>
    %38 = vector.shape_cast %37 : vector<1x1x256xf32> to vector<1x256xf32>
    %39 = vector.shape_cast %36 : vector<1x256xf32> to vector<1x1x256xf32>
    tpu.vector_store %arg4[%c0_16, %c0_17, %c0_18], %39 {strides = array<i32>} : memref<1x1x256xf32, #tpu.memory_space<vmem>>, vector<1x1x256xf32>,
    return
  }
  func.func @transform_0(%arg0: i32, %arg1: i32) -> (i32, i32, i32) {
    %c0_i32 = arith.constant 0 : i32
    %c0_i32_0 = arith.constant 0 : i32
    return %arg0, %c0_i32, %arg1 : i32, i32, i32
  }
  func.func @transform_1(%arg0: i32, %arg1: i32) -> (i32, i32, i32) {
    %c0_i32 = arith.constant 0 : i32
    %c0_i32_0 = arith.constant 0 : i32
    return %arg0, %c0_i32, %arg1 : i32, i32, i32
  }
  func.func @transform_2(%arg0: i32, %arg1: i32) -> (i32, i32, i32) {
    %c0_i32 = arith.constant 0 : i32
    %c0_i32_0 = arith.constant 0 : i32
    %c0_i32_1 = arith.constant 0 : i32
    return %arg0, %c0_i32, %c0_i32_0 : i32, i32, i32
  }
  func.func @transform_3(%arg0: i32, %arg1: i32) -> (i32, i32, i32) {
    %c0_i32 = arith.constant 0 : i32
    %c0_i32_0 = arith.constant 0 : i32
    return %arg0, %c0_i32, %arg1 : i32, i32, i32
  }
}

</mosaic_0001>

<llo_original>
// kernel: tpu_custom_call.1
$region0: #{tpu_custom_call.1}
  #allocation0 [shape = 'u32[]', space=smem, size = 0x4, offset = 0x4, fixed_abs, tag = 'smem constant byte address 0x4 - core index']
  #allocation1 [shape = 'u32[144,128]{1,0:T(1,128)}', space=vmem, size = 0x12000, scoped, tag = 'internal scratch']
  %s0 = inlined_call_operand.hbm [shape: f32[2,4,256], index: 0, kind: input, shape index: {}]
  %s1 = inlined_call_operand.hbm [shape: s32[2,1,256], index: 1, kind: input, shape index: {}]
  %s2 = inlined_call_operand.hbm [shape: f32[2,1,256], index: 2, kind: output, shape index: {0}]
  %s3 = inlined_call_operand.vmem [shape: s16[2,1,256], index: 3, kind: output, shape index: {1}]
  %4 = xla_tuple %s2, %s3
  %s5 = sld [smem:[#allocation0]]
  $region61: #{tpu_custom_call.1} parent=0
    _
  %s7 = ssub.s32 1, %s5
  %s8 = scalar_select 0, %s7, %s5
  $region1: #{tpu_custom_call.1} parent=0
    #allocation2 [shape = 'u8[8192]{0}', space=vmem, size = 0x2000, scoped, tag = 'input window, operand 0']
    #allocation3 [shape = 's32[2]{0}', space=sflag, size = 0x8, scoped, tag = 'scoped memory for tpu_custom_call.1']
    #allocation4 [shape = 's32[2]{0}', space=sflag, size = 0x8, scoped, tag = 'scoped memory for tpu_custom_call.1']
    #allocation5 [shape = 'u8[2048]{0}', space=vmem, size = 0x800, scoped, tag = 'input window, operand 1']
    #allocation6 [shape = 's32[2]{0}', space=sflag, size = 0x8, scoped, tag = 'scoped memory for tpu_custom_call.1']
    #allocation7 [shape = 'u8[2048]{0}', space=vmem, size = 0x800, scoped, tag = 'output window, operand 0']
    %9 = vsyncpa [#allocation3], 0
    %s10 = scalar_lea.sflag [#allocation3], 1
    %11 = vsyncpa %s10, 0
    %12 = vsyncpa [#allocation6], 0
    %s13 = scalar_lea.sflag [#allocation6], 1
    %14 = vsyncpa %s13, 0
    %15 = vsyncpa [#allocation4], 0
    %s16 = scalar_lea.sflag [#allocation4], 1
    %17 = vsyncpa %s16, 0
    loop: start=0, step=1, limit=4
    $region2: #{tpu_custom_call.1} parent=1 // loop_pre_header
      _
    $region3: #{tpu_custom_call.1} parent=1 // loop_header
      %s19 = sphi 0, %s23
      %p20 = scmp.ge.s32.totalorder %s19, 4
      %s26 = sphi 0, %s38
      %s27 = sphi 0, %s34
      %s28 = sphi 0, %s26
      %s29 = sphi 0, %s27
      %s30 = sphi 0, %s28
      %s31 = sphi 0, %s29
      %s43 = sphi 0, %s45
      %s46 = sphi 0, %s43
      %s47 = sphi 0, %s46
      %s63 = sphi 0, %s47
      %s71 = sphi 0, %s73
      %s74 = sphi 0, %s71
      %s75 = sphi 0, %s74
      %s91 = sphi 0, %s75
      %s97 = sphi 0, %s99
      %s100 = sphi 0, %s97
      %s101 = sphi 0, %s100
      %s117 = sphi 0, %s101
      %s125 = sphi 0, %s127
      %s128 = sphi 0, %s125
      %s129 = sphi 0, %s128
      %s145 = sphi 0, %s129
    $region4: #{tpu_custom_call.1} parent=1 // loop_header_branch
      %22 = sbr.rel (%p20) target = $region8
    $region5: #{tpu_custom_call.1} parent=1 // loop_body
      %s24 = ssub.s32 %s19, 1
      %s25 = ssub.s32 %s19, 2
      %s32 = sadd.s32 1, %s27
      %p33 = scmp.ge.s32.totalorder %s32, 1
      %s34 = scalar_select %p33, 0, %s32
      %s35 = sadd.s32 1, %s26
      %s36 = scalar_select %p33, %s35, %s26
      %p37 = scmp.ge.s32.totalorder %s36, 2
      %s38 = scalar_select %p37, 0, %s36
      %s39 = ssub.s32 %s26, %s38
      %s40 = ssub.s32 %s27, %s34
      %s41 = sor.u32 %s39, %s40
      %p42 = scmp.eq.s32.totalorder %s41, 0
      %s44 = sadd.s32 %s43, 1
      %s45 = scalar_select %p42, %s43, %s44
      %p48 = pneg %p42
      %p49 = scmp.eq.s32.totalorder %s19, 1
      %p50 = por %p48, %p49
      %p51 = scmp.ne.s32.totalorder %s43, %s46
      %p52 = scmp.eq.s32.totalorder %s19, 0
      %p53 = por %p51, %p52
      %p54 = scmp.ne.s32.totalorder %s43, %s46
      %p55 = scmp.eq.s32.totalorder %s24, 1
      %p56 = por %p54, %p55
      %p57 = scmp.ne.s32.totalorder %s46, %s47
      %p58 = scmp.eq.s32.totalorder %s24, 0
      %p59 = por %p57, %p58
      %p60 = scmp.ne.s32.totalorder %s46, %s47
      %p61 = scmp.eq.s32.totalorder %s25, 1
      %p62 = por %p60, %p61
      %p64 = scmp.ne.s32.totalorder %s47, %s63
      %p65 = scmp.eq.s32.totalorder %s25, 0
      %p66 = por %p64, %p65
      %s67 = ssub.s32 %s26, %s38
      %s68 = ssub.s32 %s27, %s34
      %s69 = sor.u32 %s67, %s68
      %p70 = scmp.eq.s32.totalorder %s69, 0
      %s72 = sadd.s32 %s71, 1
      %s73 = scalar_select %p70, %s71, %s72
      %p76 = pneg %p70
      %p77 = scmp.eq.s32.totalorder %s19, 1
      %p78 = por %p76, %p77
      %p79 = scmp.ne.s32.totalorder %s71, %s74
      %p80 = scmp.eq.s32.totalorder %s19, 0
      %p81 = por %p79, %p80
      %p82 = scmp.ne.s32.totalorder %s71, %s74
      %p83 = scmp.eq.s32.totalorder %s24, 1
      %p84 = por %p82, %p83
      %p85 = scmp.ne.s32.totalorder %s74, %s75
      %p86 = scmp.eq.s32.totalorder %s24, 0
      %p87 = por %p85, %p86
      %p88 = scmp.ne.s32.totalorder %s74, %s75
      %p89 = scmp.eq.s32.totalorder %s25, 1
      %p90 = por %p88, %p89
      %p92 = scmp.ne.s32.totalorder %s75, %s91
      %p93 = scmp.eq.s32.totalorder %s25, 0
      %p94 = por %p92, %p93
      %s95 = ssub.s32 %s26, %s38
      %p96 = scmp.eq.s32.totalorder %s95, 0
      %s98 = sadd.s32 %s97, 1
      %s99 = scalar_select %p96, %s97, %s98
      %p102 = pneg %p96
      %p103 = scmp.eq.s32.totalorder %s19, 1
      %p104 = por %p102, %p103
      %p105 = scmp.ne.s32.totalorder %s97, %s100
      %p106 = scmp.eq.s32.totalorder %s19, 0
      %p107 = por %p105, %p106
      %p108 = scmp.ne.s32.totalorder %s97, %s100
      %p109 = scmp.eq.s32.totalorder %s24, 1
      %p110 = por %p108, %p109
      %p111 = scmp.ne.s32.totalorder %s100, %s101
      %p112 = scmp.eq.s32.totalorder %s24, 0
      %p113 = por %p111, %p112
      %p114 = scmp.ne.s32.totalorder %s100, %s101
      %p115 = scmp.eq.s32.totalorder %s25, 1
      %p116 = por %p114, %p115
      %p118 = scmp.ne.s32.totalorder %s101, %s117
      %p119 = scmp.eq.s32.totalorder %s25, 0
      %p120 = por %p118, %p119
      %s121 = ssub.s32 %s26, %s38
      %s122 = ssub.s32 %s27, %s34
      %s123 = sor.u32 %s121, %s122
      %p124 = scmp.eq.s32.totalorder %s123, 0
      %s126 = sadd.s32 %s125, 1
      %s127 = scalar_select %p124, %s125, %s126
      %p130 = pneg %p124
      %p131 = scmp.eq.s32.totalorder %s19, 1
      %p132 = por %p130, %p131
      %p133 = scmp.ne.s32.totalorder %s125, %s128
      %p134 = scmp.eq.s32.totalorder %s19, 0
      %p135 = por %p133, %p134
      %p136 = scmp.ne.s32.totalorder %s125, %s128
      %p137 = scmp.eq.s32.totalorder %s24, 1
      %p138 = por %p136, %p137
      %p139 = scmp.ne.s32.totalorder %s128, %s129
      %p140 = scmp.eq.s32.totalorder %s24, 0
      %p141 = por %p139, %p140
      %p142 = scmp.ne.s32.totalorder %s128, %s129
      %p143 = scmp.eq.s32.totalorder %s25, 1
      %p144 = por %p142, %p143
      %p146 = scmp.ne.s32.totalorder %s129, %s145
      %p147 = scmp.eq.s32.totalorder %s25, 0
      %p148 = por %p146, %p147
      %p149 = scmp.le.s32.totalorder 1, %s19
      %p150 = scmp.lt.s32.totalorder %s19, 3
      %p151 = pnand %p149, %p150
      %p152 = pneg %p151
      // Predicated region
      $region9: #{tpu_custom_call.1} parent=5 // pred_check
        _
      $region10: #{tpu_custom_call.1} parent=5 // pred_check_branch
        %154 = sbr.rel (%p151) target = $region12
      $region11: #{tpu_custom_call.1} parent=5 // pred_region
        %s155 = ssub.s32 %s19, 1
      $region12: #{tpu_custom_call.1} parent=5 // pred_fallthru
        _
      %p156 = scmp.lt.s32.totalorder %s19, 2
      // Predicated region
      $region13: #{tpu_custom_call.1} parent=5 // pred_check
        %p157 = pneg %p156
      $region14: #{tpu_custom_call.1} parent=5 // pred_check_branch
        %159 = sbr.rel (%p157) target = $region16
      $region15: #{tpu_custom_call.1} parent=5 // pred_region
        // Predicated region
        $region17: #{tpu_custom_call.1} parent=15 // pred_check
          %p160 = pneg %p53
        $region18: #{tpu_custom_call.1} parent=15 // pred_check_branch
          %162 = sbr.rel (%p160) target = $region20
        $region19: #{tpu_custom_call.1} parent=15 // pred_region
          %s163 = sand.u32 %s43, 1
          %s164 = scalar_lea.sflag [#allocation3], %s163
          %s165 = sand.u32 %s43, 1
          %s166 = smul.addr %s165, 8
          %s167 = scalar_lea.vmem [#allocation2], %s166
          %s168 = smul.u32 2, %s27
          %s170 = ssub.s32 128, 128
          %171 = vsyncadd %s164, %s170
          %s172 = smul.addr %s26, 2
          %s173 = sadd.s32 %s168, %s172
          %s174 = smul.addr %s173, 64
          %s175 = scalar_lea.hbm %s0, %s174
          %s177 = sshll.u32 %s167, 4
          %s178 = int_to_ptr.vmem [resolvable:$true] %s177
          %180 = dma.hbm_to_vmem [thread:$0]  %s175, 128, %s178, %s164
        $region20: #{tpu_custom_call.1} parent=15 // pred_fallthru
          _
        // Predicated region
        $region21: #{tpu_custom_call.1} parent=15 // pred_check
          %p181 = pneg %p81
        $region22: #{tpu_custom_call.1} parent=15 // pred_check_branch
          %183 = sbr.rel (%p181) target = $region24
        $region23: #{tpu_custom_call.1} parent=15 // pred_region
          %s184 = sand.u32 %s71, 1
          %s185 = scalar_lea.sflag [#allocation6], %s184
          %s186 = sand.u32 %s71, 1
          %s187 = smul.addr %s186, 2
          %s188 = scalar_lea.vmem [#allocation5], %s187
          %s189 = smul.u32 2, %s27
          %s191 = ssub.s32 32, 32
          %192 = vsyncadd %s185, %s191
          %s193 = smul.addr %s26, 2
          %s194 = sadd.s32 %s189, %s193
          %s195 = smul.addr %s194, 16
          %s196 = scalar_lea.hbm %s1, %s195
          %s198 = sshll.u32 %s188, 4
          %s199 = int_to_ptr.vmem [resolvable:$true] %s198
          %201 = dma.hbm_to_vmem [thread:$0]  %s196, 32, %s199, %s185
        $region24: #{tpu_custom_call.1} parent=15 // pred_fallthru
          _
      $region16: #{tpu_custom_call.1} parent=5 // pred_fallthru
        _
      %p202 = scmp.le.s32.totalorder 1, %s19
      %p203 = scmp.lt.s32.totalorder %s19, 3
      %p204 = pnand %p202, %p203
      %p205 = pneg %p204
      // Predicated region
      $region25: #{tpu_custom_call.1} parent=5 // pred_check
        _
      $region26: #{tpu_custom_call.1} parent=5 // pred_check_branch
        %207 = sbr.rel (%p204) target = $region28
      $region27: #{tpu_custom_call.1} parent=5 // pred_region
        %s208 = ssub.s32 %s19, 1
        %s209 = sand.u32 %s46, 1
        %s210 = scalar_lea.sflag [#allocation3], %s209
        %s211 = sand.u32 %s46, 1
        %s212 = smul.addr %s211, 8
        %s213 = scalar_lea.vmem [#allocation2], %s212
        // Predicated region
        $region29: #{tpu_custom_call.1} parent=27 // pred_check
          %p214 = pneg %p59
        $region30: #{tpu_custom_call.1} parent=27 // pred_check_branch
          %216 = sbr.rel (%p214) target = $region32
        $region31: #{tpu_custom_call.1} parent=27 // pred_region
          %217 = dma.done %s210, 128
        $region32: #{tpu_custom_call.1} parent=27 // pred_fallthru
          _
        %s218 = sand.u32 %s74, 1
        %s219 = scalar_lea.sflag [#allocation6], %s218
        %s220 = sand.u32 %s74, 1
        %s221 = smul.addr %s220, 2
        %s222 = scalar_lea.vmem [#allocation5], %s221
        // Predicated region
        $region33: #{tpu_custom_call.1} parent=27 // pred_check
          %p223 = pneg %p87
        $region34: #{tpu_custom_call.1} parent=27 // pred_check_branch
          %225 = sbr.rel (%p223) target = $region36
        $region35: #{tpu_custom_call.1} parent=27 // pred_region
          %226 = dma.done %s219, 32
        $region36: #{tpu_custom_call.1} parent=27 // pred_fallthru
          _
        %s227 = sand.u32 %s46, 1
        %s228 = scalar_lea.sflag [#allocation3], %s227
        %s229 = sand.u32 %s46, 1
        %s230 = smul.addr %s229, 8
        %s231 = scalar_lea.vmem [#allocation2], %s230
        %p232 = pneg %p59
        %p233 = pneg %p56
        %s234 = sand.u32 %s74, 1
        %s235 = scalar_lea.sflag [#allocation6], %s234
        %s236 = sand.u32 %s74, 1
        %s237 = smul.addr %s236, 2
        %s238 = scalar_lea.vmem [#allocation5], %s237
        %p239 = pneg %p87
        %p240 = pneg %p84
        %p241 = pneg %p113
        %p242 = pneg %p110
        %s243 = sand.u32 %s100, 1
        %s244 = scalar_lea.sflag [#allocation4], %s243
        %s245 = sand.u32 %s100, 1
        %s246 = smul.addr %s245, 2
        %s247 = scalar_lea.vmem [#allocation7], %s246
        %p248 = pneg %p141
        %p249 = pneg %p138
        %s250 = smul.u32 2, %s29
        %p251 = scmp.lt.s32.totalorder %s28, 1
        %s252 = scalar_select %p251, %s28, 1
        %p253 = scmp.lt.s32.totalorder %s250, 1
        %s254 = scalar_select %p253, %s250, 1
        %s255 = smul.addr %s252, 2
        %s256 = sadd.s32 %s254, %s255
        %s257 = scalar_lea.vmem %s3, %s256
        %s258 = smul.u32 2, %s29
        %s259 = smul.u32 2, %s29
        %s260 = smul.u32 2, %s29
        %p261 = scmp.lt.s32.totalorder %s28, 1
        %s262 = scalar_select %p261, %s28, 1
        %p263 = scmp.lt.s32.totalorder %s260, 1
        %s264 = scalar_select %p263, %s260, 1
        %s265 = smul.addr %s262, 2
        %s266 = sadd.s32 %s264, %s265
        %s267 = scalar_lea.vmem %s3, %s266
        %s268 = smul.u32 2, %s29
        %v269 = vld [vmem:[%s213] sm:$0xff]
        %v270 = vld [vmem:[%s222] sm:$0x3]
        %v272 = vcombine.high %v269, %v269
        %vm274 = vcmask 1043456
        %v275 = vsel %vm274, %v269, -inf
        %v276 = vrot.slane %v275, 4
        %v277 = vmax.f32 %v275, %v276
        %v278 = vrot.slane %v277, 2
        %v279 = vmax.f32 %v277, %v278
        %v280 = vrot.slane %v279, 1
        %v281 = vmax.f32 %v279, %v280
        %v282 = vsel %vm274, %v272, -inf
        %v283 = vrot.slane %v282, 4
        %v284 = vmax.f32 %v282, %v283
        %v285 = vrot.slane %v284, 2
        %v286 = vmax.f32 %v284, %v285
        %v287 = vrot.slane %v286, 1
        %v288 = vmax.f32 %v286, %v287
        %v291 = vcombine.low %v281, %v288
        %v293 = vsub.f32 %v269, %v291
        %v294 = vmul.f32 %v293, 1.442695
        %v295 = vpow.pop %v294
        %v297 = vcombine.high %v295, %v295
        %v299 = vsel %vm274, %v295, 0.0
        %v300 = vrot.slane %v299, 4
        %v301 = vadd.f32 %v299, %v300
        %v302 = vrot.slane %v301, 2
        %v303 = vadd.f32 %v301, %v302
        %v304 = vrot.slane %v303, 1
        %v305 = vadd.f32 %v303, %v304
        %v306 = vsel %vm274, %v297, 0.0
        %v307 = vrot.slane %v306, 4
        %v308 = vadd.f32 %v306, %v307
        %v309 = vrot.slane %v308, 2
        %v310 = vadd.f32 %v308, %v309
        %v311 = vrot.slane %v310, 1
        %v312 = vadd.f32 %v310, %v311
        %v313 = vlog2.pop %v305
        %v314 = vmul.f32 %v313, 0.6931472
        %v315 = vlog2.pop %v312
        %v316 = vmul.f32 %v315, 0.6931472
        %v317 = vadd.f32 %v314, %v281
        %v318 = vadd.f32 %v316, %v288
        %v319 = vlaneseq
        %v320 = vshrl.u32 %v319, 7
        %v321 = vlaneseq
        %v322 = vshrl.u32 %v321, 7
        %v323 = vsub.s32 0, %v322
        %v324 = vrot.slane %v270, %v323
        %v325 = vlaneseq
        %v326 = vshrl.u32 %v325, 7
        %v327 = vsub.s32 1, %v326
        %v328 = vrot.slane %v270, %v327
        %vm329 = vcmp.eq.s32.totalorder %v320, %v324
        %vm330 = vcmp.eq.s32.totalorder %v320, %v328
        %v331 = vsel %vm329, %v269, 0.0
        %v332 = vsel %vm330, %v272, 0.0
        %v333 = vsel %vm274, %v331, 0.0
        %v334 = vrot.slane %v333, 4
        %v335 = vadd.f32 %v333, %v334
        %v336 = vrot.slane %v335, 2
        %v337 = vadd.f32 %v335, %v336
        %v338 = vrot.slane %v337, 1
        %v339 = vadd.f32 %v337, %v338
        %v340 = vsel %vm274, %v332, 0.0
        %v341 = vrot.slane %v340, 4
        %v342 = vadd.f32 %v340, %v341
        %v343 = vrot.slane %v342, 2
        %v344 = vadd.f32 %v342, %v343
        %v345 = vrot.slane %v344, 1
        %v346 = vadd.f32 %v344, %v345
        %v347 = vsub.f32 %v317, %v339
        %v348 = vsub.f32 %v318, %v346
        %vm349 = vcmp.eq.f32.partialorder %v269, %v291
        %v351 = vunpack.c.l.s4 839922192
        %v352 = vunpack.c.0.s8 %v351
        %v353 = vlaneseq
        %v354 = vshrl.u32 %v353, 7
        %v355 = vsub.s32 %v352, %v354
        %v356 = vrot.slane %v320, %v355
        %v357 = vsel %vm349, %v356, 4
        %v358 = vcombine.high %v357, %v357
        %v359 = vsel %vm274, %v357, 2147483647
        %v360 = vrot.slane %v359, 4
        %vm361 = vcmp.lt.s32.totalorder %v359, %v360
        %v362 = vsel %vm361, %v359, %v360
        %v363 = vrot.slane %v362, 2
        %vm364 = vcmp.lt.s32.totalorder %v362, %v363
        %v365 = vsel %vm364, %v362, %v363
        %v366 = vrot.slane %v365, 1
        %vm367 = vcmp.lt.s32.totalorder %v365, %v366
        %v368 = vsel %vm367, %v365, %v366
        %v369 = vsel %vm274, %v358, 2147483647
        %v370 = vrot.slane %v369, 4
        %vm371 = vcmp.lt.s32.totalorder %v369, %v370
        %v372 = vsel %vm371, %v369, %v370
        %v373 = vrot.slane %v372, 2
        %vm374 = vcmp.lt.s32.totalorder %v372, %v373
        %v375 = vsel %vm374, %v372, %v373
        %v376 = vrot.slane %v375, 1
        %vm377 = vcmp.lt.s32.totalorder %v375, %v376
        %v378 = vsel %vm377, %v375, %v376
        %v379 = vpack.c.b16 %v368, %v368
        %v380 = vpack.c.b16 %v378, %v378
        %v381 = vcombine.low %v379, %v380
        %v383 = vunpack.c.l.s4 1966171168
        %v384 = vunpack.c.0.s8 %v383
        %v385 = vlaneseq
        %v386 = vshrl.u32 %v385, 7
        %v387 = vsub.s32 %v384, %v386
        %v388 = vrot.slane %v381, %v387
        %v390 = vunpack.c.l.s4 1966171168
        %v391 = vunpack.c.0.s8 %v390
        %v392 = vlaneseq
        %v393 = vshrl.u32 %v392, 7
        %v394 = vsub.s32 %v391, %v393
        %v395 = vrot.slane %v388, %v394
        %vm396 = vcmask 1040384
        %vm397 = vsmask.f32 256
        %vm398 = vmand %vm396, %vm397
        %vm399 = vcmask 1041409
        %vm400 = vsmask.f32 1280
        %vm401 = vmand %vm399, %vm400
        %vm402 = vmor %vm401, %vm398
        %v403 = vld [vmem:[%s267] sm:$0x3]
        %v404 = vsel %vm402, %v395, %v403
        %405 = vst [vmem:[%s267] sm:$0x3] %v404
        %p406 = scmp.eq.s32.totalorder %s29, 0
        // Predicated region
        $region37: #{tpu_custom_call.1} parent=27 // pred_check
          %p407 = pneg %p406
        $region38: #{tpu_custom_call.1} parent=27 // pred_check_branch
          %409 = sbr.rel (%p407) target = $region40
        $region39: #{tpu_custom_call.1} parent=27 // pred_region
          %v410 = vlaneseq
          %vm411 = vcmp.ge.s32.totalorder %v410, 0
          %vm412 = vcmp.lt.s32.totalorder %v410, 256
          %vm413 = vmand %vm411, %vm412
          %414 = vst.msk [vmem:[%s247] sm:$0x3] %vm413, 0.0
        $region40: #{tpu_custom_call.1} parent=27 // pred_fallthru
          _
        %v415 = vld [vmem:[%s247] sm:$0x3]
        %v418 = vcombine.low %v347, %v348
        %v420 = vunpack.c.l.s4 1966171168
        %v421 = vunpack.c.0.s8 %v420
        %v422 = vlaneseq
        %v423 = vshrl.u32 %v422, 7
        %v424 = vsub.s32 %v421, %v423
        %v425 = vrot.slane %v418, %v424
        %v427 = vunpack.c.l.s4 1966171168
        %v428 = vunpack.c.0.s8 %v427
        %v429 = vlaneseq
        %v430 = vshrl.u32 %v429, 7
        %v431 = vsub.s32 %v428, %v430
        %v432 = vrot.slane %v425, %v431
        %v434 = vadd.f32 %v415, %v432
        %v435 = vlaneseq
        %vm436 = vcmp.ge.s32.totalorder %v435, 0
        %vm437 = vcmp.lt.s32.totalorder %v435, 256
        %vm438 = vmand %vm436, %vm437
        %439 = vst.msk [vmem:[%s247] sm:$0x3] %vm438, %v434
        %s440 = sand.u32 %s100, 1
        %s441 = scalar_lea.sflag [#allocation4], %s440
        %s442 = sand.u32 %s100, 1
        %s443 = smul.addr %s442, 2
        %s444 = scalar_lea.vmem [#allocation7], %s443
        %s445 = smul.u32 2, %s29
        %p446 = scmp.lt.s32.totalorder %s28, 1
        %s447 = scalar_select %p446, %s28, 1
        %p448 = scmp.lt.s32.totalorder %s445, 1
        %s449 = scalar_select %p448, %s445, 1
        %s450 = smul.addr %s447, 2
        %s451 = sadd.s32 %s449, %s450
        %s452 = scalar_lea.vmem %s3, %s451
        // Predicated region
        $region41: #{tpu_custom_call.1} parent=27 // pred_check
          %p453 = pneg %p110
        $region42: #{tpu_custom_call.1} parent=27 // pred_check_branch
          %455 = sbr.rel (%p453) target = $region44
        $region43: #{tpu_custom_call.1} parent=27 // pred_region
          %s457 = ssub.s32 32, 32
          %458 = vsyncadd %s441, %s457
          %s459 = smul.addr %s28, 2
          %s460 = smul.addr %s459, 16
          %s461 = scalar_lea.hbm %s2, %s460
          %s463 = sshll.u32 %s444, 4
          %s464 = int_to_ptr.vmem [resolvable:$true] %s463
          %466 = dma.vmem_to_hbm [thread:$0]  %s464, 32, %s461, %s441
        $region44: #{tpu_custom_call.1} parent=27 // pred_fallthru
          _
        // Predicated region
        $region45: #{tpu_custom_call.1} parent=27 // pred_check
          %p467 = pneg %p138
        $region46: #{tpu_custom_call.1} parent=27 // pred_check_branch
          %469 = sbr.rel (%p467) target = $region48
        $region47: #{tpu_custom_call.1} parent=27 // pred_region
          %s470 = smul.u32 2, %s29
        $region48: #{tpu_custom_call.1} parent=27 // pred_fallthru
          _
      $region28: #{tpu_custom_call.1} parent=5 // pred_fallthru
        _
      %p471 = scmp.le.s32.totalorder 2, %s19
      // Predicated region
      $region49: #{tpu_custom_call.1} parent=5 // pred_check
        %p472 = pneg %p471
      $region50: #{tpu_custom_call.1} parent=5 // pred_check_branch
        %474 = sbr.rel (%p472) target = $region52
      $region51: #{tpu_custom_call.1} parent=5 // pred_region
        %s475 = ssub.s32 %s19, 2
        // Predicated region
        $region53: #{tpu_custom_call.1} parent=51 // pred_check
          %p476 = pneg %p116
        $region54: #{tpu_custom_call.1} parent=51 // pred_check_branch
          %478 = sbr.rel (%p476) target = $region56
        $region55: #{tpu_custom_call.1} parent=51 // pred_region
          %s479 = sand.u32 %s101, 1
          %s480 = scalar_lea.sflag [#allocation4], %s479
          %s481 = sand.u32 %s101, 1
          %s482 = smul.addr %s481, 2
          %s483 = scalar_lea.vmem [#allocation7], %s482
          %484 = dma.done %s480, 32
        $region56: #{tpu_custom_call.1} parent=51 // pred_fallthru
          _
        // Predicated region
        $region57: #{tpu_custom_call.1} parent=51 // pred_check
          %p485 = pneg %p144
        $region58: #{tpu_custom_call.1} parent=51 // pred_check_branch
          %487 = sbr.rel (%p485) target = $region60
        $region59: #{tpu_custom_call.1} parent=51 // pred_region
          %s488 = smul.u32 2, %s31
          %p489 = scmp.lt.s32.totalorder %s30, 1
          %s490 = scalar_select %p489, %s30, 1
          %p491 = scmp.lt.s32.totalorder %s488, 1
          %s492 = scalar_select %p491, %s488, 1
          %s493 = smul.addr %s490, 2
          %s494 = sadd.s32 %s492, %s493
          %s495 = scalar_lea.vmem %s3, %s494
        $region60: #{tpu_custom_call.1} parent=51 // pred_fallthru
          _
      $region52: #{tpu_custom_call.1} parent=5 // pred_fallthru
        _
    $region6: #{tpu_custom_call.1} parent=1 // loop_footer
      %s23 = sadd.s32 1, %s19
    $region7: #{tpu_custom_call.1} parent=1 // loop_footer_branch
      %18 = sbr.rel target = $region3
    $region8: #{tpu_custom_call.1} parent=1 // loop_exit
      _
    %496 = vsyncpa [#allocation3], 1
    %s497 = scalar_lea.sflag [#allocation3], 1
    %498 = vsyncpa %s497, 1
    %499 = vsyncpa [#allocation6], 1
    %s500 = scalar_lea.sflag [#allocation6], 1
    %501 = vsyncpa %s500, 1
    %502 = vsyncpa [#allocation4], 1
    %s503 = scalar_lea.sflag [#allocation4], 1
    %504 = vsyncpa %s503, 1

</llo_original>
